<compile_context>
chip_gen: v5e
topology: v5e:2x2
jax: 0.10.0
libtpu: 0.0.40
codegen_flags: <defaults>
</compile_context>

<pallas_src>
import functools

import jax
import jax.numpy as jnp
from jax.experimental import pallas as pl
from jax.experimental.pallas import tpu as pltpu


def _round_up(x, m):
    return (x + m - 1) // m * m


def _choose_row_tile(n_rows, requested):
    """Row tile: multiple of 16, >=2 grid steps when possible (v7x has two
    TensorCores), rounded to 256 when large (whole 256x256 MXU M passes)."""
    requested = max(16, int(requested))
    if n_rows <= 16:
        return 16
    half = _round_up(pl.cdiv(n_rows, 2), 16)      # guarantees >=2 grid steps
    tile = min(_round_up(requested, 16), half)
    if tile >= 256:
        tile = _round_up(tile, 256)
    return tile


def detr_head_kernel(x_ref, w01_ref, b01_ref, w2_ref, b2_ref, w3_ref, b3_ref,
                     out_ref, *, c1):
    """One row-tile of the DETR head.

    Single merged output tile of width out_cols = round_up(C1+4, 128):
      cols [0, C1)     -> class logits
      cols [C1, C1+4)  -> sigmoid box coords
      cols [C1+4, ...) -> zero padding (keeps stores lane-dense / unmasked)
    """
    cdt = w2_ref.dtype                        # compute dtype (bf16 or f32)
    out_cols = out_ref.shape[-1]

    x = x_ref[...].astype(cdt)                # f32 HBM read, cast on the VPU

    # Fused first layer: [class_embed | bbox_embed layer 1] in one matmul.
    y = jnp.dot(x, w01_ref[...], preferred_element_type=jnp.float32)
    y = y + b01_ref[...]
    logits = y[:, :out_cols]                  # zero in cols >= C1 (padded W/b)
    h = jnp.maximum(y[:, out_cols:], 0.0).astype(cdt)

    # bbox_embed layers 2 & 3.
    h = jnp.dot(h, w2_ref[...], preferred_element_type=jnp.float32) + b2_ref[...]
    h = jnp.maximum(h, 0.0).astype(cdt)
    box = jnp.dot(h, w3_ref[...], preferred_element_type=jnp.float32) + b3_ref[...]

    # Pack sigmoid(box) into lanes [C1, C1+4), logits everywhere else, and do
    # one full-width store.  (box is a single lane-tile wide, so the sigmoid
    # costs the same number of EUP vregs as a 4-wide sigmoid would.)
    col = jax.lax.broadcasted_iota(jnp.int32, box.shape, 1)
    box_mask = (col >= c1) & (col < c1 + 4)
    merged = jnp.where(box_mask, jax.nn.sigmoid(box), logits)
    out_ref[...] = merged.astype(out_ref.dtype)


def detr_head_forward(hs, params, *, row_tile=2048, aux_loss=True,
                      compute_dtype=jnp.bfloat16, out_dtype=jnp.bfloat16):
    """hs: [L, B, Q, H].  Returns the DetrHead.forward output dict."""
    L, B, Q, H = hs.shape
    N = L * B * Q

    wc, bc = params["class_w"], params["class_b"]   # (H, C1), (1, C1)
    w1, b1 = params["mlp_w1"], params["mlp_b1"]     # (H, H),  (1, H)
    w2, b2 = params["mlp_w2"], params["mlp_b2"]     # (H, H),  (1, H)
    w3, b3 = params["mlp_w3"], params["mlp_b3"]     # (H, 4),  (1, 4)
    C1 = wc.shape[1]

    # Single lane-dense output: logits in cols [0,C1), boxes in [C1,C1+4).
    out_cols = _round_up(C1 + 4, 128)

    # Fused first-layer weight [class_embed | bbox layer 1]; padded logit
    # columns are zero so the merged output's pad lanes come out zero.
    w01 = jnp.zeros((H, out_cols + H), compute_dtype)
    w01 = w01.at[:, :C1].set(wc.astype(compute_dtype))
    w01 = w01.at[:, out_cols:].set(w1.astype(compute_dtype))
    b01 = jnp.zeros((1, out_cols + H), jnp.float32)
    b01 = b01.at[:, :C1].set(bc.astype(jnp.float32))
    b01 = b01.at[:, out_cols:].set(b1.astype(jnp.float32))

    w2_c = w2.astype(compute_dtype)
    b2_f = b2.astype(jnp.float32)
    w3_p = jnp.zeros((H, out_cols), compute_dtype).at[:, C1:C1 + 4].set(
        w3.astype(compute_dtype))
    b3_p = jnp.zeros((1, out_cols), jnp.float32).at[:, C1:C1 + 4].set(
        b3.astype(jnp.float32))

    # No wrapper-side HBM passes: reshape is metadata-only, no pad, no cast
    # (the cast to compute_dtype happens inside the kernel on the VPU).
    x = hs.reshape(N, H)

    row_tile = _choose_row_tile(N, row_tile)
    grid = (pl.cdiv(N, row_tile),)   # Pallas masks the partial final block.

    itemsize_c = jnp.dtype(compute_dtype).itemsize
    cost = pl.CostEstimate(
        flops=int(2 * N * H * (2 * out_cols + 2 * H)),
        transcendentals=int(N * out_cols),
        bytes_accessed=int(
            N * H * x.dtype.itemsize                                 # input
            + (w01.size + w2_c.size + w3_p.size) * itemsize_c        # weights
            + (b01.size + b2_f.size + b3_p.size) * 4                 # biases
            + N * out_cols * jnp.dtype(out_dtype).itemsize),         # output
    )

    def const_spec(arr):
        # Constant index_map -> fetched once, kept resident in VMEM.
        return pl.BlockSpec(arr.shape, lambda i: (0, 0))

    merged = pl.pallas_call(
        functools.partial(detr_head_kernel, c1=C1),
        out_shape=jax.ShapeDtypeStruct((N, out_cols), out_dtype),
        grid_spec=pltpu.PrefetchScalarGridSpec(
            num_scalar_prefetch=0,
            grid=grid,
            in_specs=[
                pl.BlockSpec((row_tile, H), lambda i: (i, 0)),   # x row tile
                const_spec(w01), const_spec(b01),
                const_spec(w2_c), const_spec(b2_f),
                const_spec(w3_p), const_spec(b3_p),
            ],
            out_specs=pl.BlockSpec((row_tile, out_cols), lambda i: (i, 0)),
        ),
        compiler_params=pltpu.CompilerParams(
            dimension_semantics=("parallel",),
            vmem_limit_bytes=32 * 1024 * 1024),
        cost_estimate=cost,
    )(x, w01, b01, w2_c, b2_f, w3_p, b3_p)

    outputs_class = merged[:, :C1].reshape(L, B, Q, C1)
    outputs_coord = merged[:, C1:C1 + 4].reshape(L, B, Q, 4)

    out = {"pred_logits": outputs_class[-1], "pred_boxes": outputs_coord[-1]}
    if aux_loss:
        out["aux_outputs"] = [
            {"pred_logits": outputs_class[i], "pred_boxes": outputs_coord[i]}
            for i in range(L - 1)
        ]
    # TODO(synk): SetCriterion loss (Hungarian matching + CE/L1/GIoU) is a
    # training-time, data-dependent loss, not part of forward(); not kernelized.
    return out


def init_params(key, hidden_dim, num_classes):
    """Deterministic synthetic parameters (shapes follow DetrHead.__init__)."""
    c1 = num_classes + 1
    ks = jax.random.split(key, 8)
    s = 0.02
    return {
        "class_w": s * jax.random.normal(ks[0], (hidden_dim, c1), jnp.float32),
        "class_b": jnp.zeros((1, c1), jnp.float32),
        "mlp_w1": s * jax.random.normal(ks[1], (hidden_dim, hidden_dim), jnp.float32),
        "mlp_b1": 0.01 * jnp.ones((1, hidden_dim), jnp.float32),
        "mlp_w2": s * jax.random.normal(ks[2], (hidden_dim, hidden_dim), jnp.float32),
        "mlp_b2": 0.01 * jnp.ones((1, hidden_dim), jnp.float32),
        "mlp_w3": s * jax.random.normal(ks[3], (hidden_dim, 4), jnp.float32),
        "mlp_b3": jnp.zeros((1, 4), jnp.float32),
    }


def reference_forward(hs, params):
    """Plain-JAX f32 reference."""
    logits = hs @ params["class_w"] + params["class_b"][0]
    h = jnp.maximum(hs @ params["mlp_w1"] + params["mlp_b1"][0], 0.0)
    h = jnp.maximum(h @ params["mlp_w2"] + params["mlp_b2"][0], 0.0)
    boxes = jax.nn.sigmoid(h @ params["mlp_w3"] + params["mlp_b3"][0])
    return logits, boxes


if __name__ == "__main__":
    key = jax.random.PRNGKey(0)
    k_hs, k_hs2, k_p = jax.random.split(key, 3)

    # Small shapes: 6 decoder layers, batch 2, 8 queries, hidden 32, 7 classes.
    L, B, Q, H, NUM_CLASSES = 6, 2, 8, 32, 7
    hs = jax.random.normal(k_hs, (L, B, Q, H), jnp.float32)
    params = init_params(k_p, H, NUM_CLASSES)

    # Production path: bf16 compute + bf16 merged output, default row tile
    # (clamped so the grid still has 2 parallel steps for v7x).
    out = detr_head_forward(hs, params, aux_loss=True)
    jax.block_until_ready(out)

    # f32 path for a tight numerical check against the plain-JAX reference.
    out_f32 = detr_head_forward(hs, params, aux_loss=True,
                                compute_dtype=jnp.float32,
                                out_dtype=jnp.float32)
    jax.block_until_ready(out_f32)

    ref_logits, ref_boxes = reference_forward(hs, params)

    # Exact-path checks (f32 kernel).
    assert jnp.allclose(out_f32["pred_logits"], ref_logits[-1], atol=1e-5)
    assert jnp.allclose(out_f32["pred_boxes"], ref_boxes[-1], atol=1e-5)
    assert jnp.allclose(out_f32["aux_outputs"][0]["pred_logits"], ref_logits[0], atol=1e-5)
    assert jnp.allclose(out_f32["aux_outputs"][0]["pred_boxes"], ref_boxes[0], atol=1e-5)

    # Un-padded path with a partial final grid block (N = 6*2*7 = 84 rows,
    # tile 48 -> last block only 36 valid rows) to exercise Pallas's masking.
    hs2 = jax.random.normal(k_hs2, (L, B, 7, H), jnp.float32)
    out2 = detr_head_forward(hs2, params, aux_loss=False,
                             compute_dtype=jnp.float32, out_dtype=jnp.float32)
    jax.block_until_ready(out2)
    ref_logits2, ref_boxes2 = reference_forward(hs2, params)
    assert jnp.allclose(out2["pred_logits"], ref_logits2[-1], atol=1e-5)
    assert jnp.allclose(out2["pred_boxes"], ref_boxes2[-1], atol=1e-5)

    # Mixed-precision path checks (bf16 compute + bf16 output, f32 accumulate).
    assert jnp.allclose(out["pred_logits"], ref_logits[-1], atol=2e-2)
    assert jnp.allclose(out["pred_boxes"], ref_boxes[-1], atol=2e-2)
    assert len(out["aux_outputs"]) == L - 1
    assert out["pred_logits"].shape == (B, Q, NUM_CLASSES + 1)
    assert out["pred_boxes"].shape == (B, Q, 4)

    print("KERNEL_OK")
</pallas_src>

<mosaic_0001>
module attributes {stable_mosaic.version = 11 : i64} {
  func.func @detr_head_kernel(%arg0: i32, %arg1: memref<48x32xf32, #tpu.memory_space<vmem>>, %arg2: memref<32x160xbf16, #tpu.memory_space<vmem>>, %arg3: memref<1x160xf32, #tpu.memory_space<vmem>>, %arg4: memref<32x32xbf16, #tpu.memory_space<vmem>>, %arg5: memref<1x32xf32, #tpu.memory_space<vmem>>, %arg6: memref<32x128xbf16, #tpu.memory_space<vmem>>, %arg7: memref<1x128xf32, #tpu.memory_space<vmem>>, %arg8: memref<48x128xbf16, #tpu.memory_space<vmem>>) attributes {dimension_semantics = [#tpu.dimension_semantics<parallel>], iteration_bounds = array<i64: 2>, scalar_prefetch = 0 : i64, scratch_operands = 0 : i64, tpu.core_type = #tpu.core_type<tc>, window_params = [{transform_indices = @transform_0, window_bounds = array<i64: 48, 32>}, {pipeline_mode = #tpu.pipeline_mode<synchronous>, transform_indices = @transform_1, window_bounds = array<i64: 32, 160>}, {pipeline_mode = #tpu.pipeline_mode<synchronous>, transform_indices = @transform_2, window_bounds = array<i64: 1, 160>}, {pipeline_mode = #tpu.pipeline_mode<synchronous>, transform_indices = @transform_3, window_bounds = array<i64: 32, 32>}, {pipeline_mode = #tpu.pipeline_mode<synchronous>, transform_indices = @transform_4, window_bounds = array<i64: 1, 32>}, {pipeline_mode = #tpu.pipeline_mode<synchronous>, transform_indices = @transform_5, window_bounds = array<i64: 32, 128>}, {pipeline_mode = #tpu.pipeline_mode<synchronous>, transform_indices = @transform_6, window_bounds = array<i64: 1, 128>}, {transform_indices = @transform_7, window_bounds = array<i64: 48, 128>}]} {
    %c0 = arith.constant 0 : index
    %c0_0 = arith.constant 0 : index
    %0 = vector.load %arg1[%c0, %c0_0] : memref<48x32xf32, #tpu.memory_space<vmem>>, vector<48x32xf32>
    %1 = arith.truncf %0 : vector<48x32xf32> to vector<48x32xbf16>
    %c0_1 = arith.constant 0 : index
    %c0_2 = arith.constant 0 : index
    %2 = vector.load %arg2[%c0_1, %c0_2] : memref<32x160xbf16, #tpu.memory_space<vmem>>, vector<32x160xbf16>
    %cst = arith.constant dense<0.000000e+00> : vector<48x160xf32>
    %3 = tpu.matmul %1, %2, %cst {dimension_numbers = #tpu.dot_dimension_numbers<[1], [0], [0], [1], [0, 0, 1, 1], [], []>} : vector<48x32xbf16>, vector<32x160xbf16>, vector<48x160xf32> -> vector<48x160xf32>
    %c0_3 = arith.constant 0 : index
    %c0_4 = arith.constant 0 : index
    %4 = vector.load %arg3[%c0_3, %c0_4] : memref<1x160xf32, #tpu.memory_space<vmem>>, vector<1x160xf32>
    %5 = vector.broadcast %4 : vector<1x160xf32> to vector<48x160xf32>
    %6 = arith.addf %3, %5 : vector<48x160xf32>
    %7 = vector.extract_strided_slice %6 {offsets = [0, 0], sizes = [48, 128], strides = [1, 1]} : vector<48x160xf32> to vector<48x128xf32>
    %8 = vector.extract_strided_slice %6 {offsets = [0, 128], sizes = [48, 32], strides = [1, 1]} : vector<48x160xf32> to vector<48x32xf32>
    %cst_5 = arith.constant 0.000000e+00 : f32
    %9 = vector.broadcast %cst_5 : f32 to vector<48x32xf32>
    %10 = arith.maximumf %8, %9 : vector<48x32xf32>
    %11 = arith.truncf %10 : vector<48x32xf32> to vector<48x32xbf16>
    %c0_6 = arith.constant 0 : index
    %c0_7 = arith.constant 0 : index
    %12 = vector.load %arg4[%c0_6, %c0_7] : memref<32x32xbf16, #tpu.memory_space<vmem>>, vector<32x32xbf16>
    %cst_8 = arith.constant dense<0.000000e+00> : vector<48x32xf32>
    %13 = tpu.matmul %11, %12, %cst_8 {dimension_numbers = #tpu.dot_dimension_numbers<[1], [0], [0], [1], [0, 0, 1, 1], [], []>} : vector<48x32xbf16>, vector<32x32xbf16>, vector<48x32xf32> -> vector<48x32xf32>
    %c0_9 = arith.constant 0 : index
    %c0_10 = arith.constant 0 : index
    %14 = vector.load %arg5[%c0_9, %c0_10] : memref<1x32xf32, #tpu.memory_space<vmem>>, vector<1x32xf32>
    %15 = vector.broadcast %14 : vector<1x32xf32> to vector<48x32xf32>
    %16 = arith.addf %13, %15 : vector<48x32xf32>
    %cst_11 = arith.constant 0.000000e+00 : f32
    %17 = vector.broadcast %cst_11 : f32 to vector<48x32xf32>
    %18 = arith.maximumf %16, %17 : vector<48x32xf32>
    %19 = arith.truncf %18 : vector<48x32xf32> to vector<48x32xbf16>
    %c0_12 = arith.constant 0 : index
    %c0_13 = arith.constant 0 : index
    %20 = vector.load %arg6[%c0_12, %c0_13] : memref<32x128xbf16, #tpu.memory_space<vmem>>, vector<32x128xbf16>
    %cst_14 = arith.constant dense<0.000000e+00> : vector<48x128xf32>
    %21 = tpu.matmul %19, %20, %cst_14 {dimension_numbers = #tpu.dot_dimension_numbers<[1], [0], [0], [1], [0, 0, 1, 1], [], []>} : vector<48x32xbf16>, vector<32x128xbf16>, vector<48x128xf32> -> vector<48x128xf32>
    %c0_15 = arith.constant 0 : index
    %c0_16 = arith.constant 0 : index
    %22 = vector.load %arg7[%c0_15, %c0_16] : memref<1x128xf32, #tpu.memory_space<vmem>>, vector<1x128xf32>
    %23 = vector.broadcast %22 : vector<1x128xf32> to vector<48x128xf32>
    %24 = arith.addf %21, %23 : vector<48x128xf32>
    %25 = tpu.iota {dimensions = array<i32: 1>} : vector<48x128xi32>
    %c8_i32 = arith.constant 8 : i32
    %26 = vector.broadcast %c8_i32 : i32 to vector<48x128xi32>
    %27 = arith.cmpi sge, %25, %26 : vector<48x128xi32>
    %c12_i32 = arith.constant 12 : i32
    %28 = vector.broadcast %c12_i32 : i32 to vector<48x128xi32>
    %29 = arith.cmpi slt, %25, %28 : vector<48x128xi32>
    %30 = arith.andi %27, %29 : vector<48x128xi1>
    %31 = arith.negf %24 : vector<48x128xf32>
    %32 = math.exp %31 : vector<48x128xf32>
    %cst_17 = arith.constant 1.000000e+00 : f32
    %33 = vector.broadcast %cst_17 : f32 to vector<48x128xf32>
    %34 = arith.addf %33, %32 : vector<48x128xf32>
    %35 = arith.divf %33, %34 : vector<48x128xf32>
    %36 = arith.select %30, %35, %7 : vector<48x128xi1>, vector<48x128xf32>
    %37 = arith.truncf %36 : vector<48x128xf32> to vector<48x128xbf16>
    %c0_18 = arith.constant 0 : index
    %c0_19 = arith.constant 0 : index
    %38 = vector.load %arg8[%c0_18, %c0_19] : memref<48x128xbf16, #tpu.memory_space<vmem>>, vector<48x128xbf16>
    tpu.vector_store %arg8[%c0_18, %c0_19], %37 {strides = array<i32>} : memref<48x128xbf16, #tpu.memory_space<vmem>>, vector<48x128xbf16>,
    return
  }
  func.func @transform_0(%arg0: i32) -> (i32, i32) {
    %c0_i32 = arith.constant 0 : i32
    %c0_i32_0 = arith.constant 0 : i32
    return %arg0, %c0_i32 : i32, i32
  }
  func.func @transform_1(%arg0: i32) -> (i32, i32) {
    %c0_i32 = arith.constant 0 : i32
    %c0_i32_0 = arith.constant 0 : i32
    %c0_i32_1 = arith.constant 0 : i32
    return %c0_i32, %c0_i32_0 : i32, i32
  }
  func.func @transform_2(%arg0: i32) -> (i32, i32) {
    %c0_i32 = arith.constant 0 : i32
    %c0_i32_0 = arith.constant 0 : i32
    %c0_i32_1 = arith.constant 0 : i32
    return %c0_i32, %c0_i32_0 : i32, i32
  }
  func.func @transform_3(%arg0: i32) -> (i32, i32) {
    %c0_i32 = arith.constant 0 : i32
    %c0_i32_0 = arith.constant 0 : i32
    %c0_i32_1 = arith.constant 0 : i32
    return %c0_i32, %c0_i32_0 : i32, i32
  }
  func.func @transform_4(%arg0: i32) -> (i32, i32) {
    %c0_i32 = arith.constant 0 : i32
    %c0_i32_0 = arith.constant 0 : i32
    %c0_i32_1 = arith.constant 0 : i32
    return %c0_i32, %c0_i32_0 : i32, i32
  }
  func.func @transform_5(%arg0: i32) -> (i32, i32) {
    %c0_i32 = arith.constant 0 : i32
    %c0_i32_0 = arith.constant 0 : i32
    %c0_i32_1 = arith.constant 0 : i32
    return %c0_i32, %c0_i32_0 : i32, i32
  }
  func.func @transform_6(%arg0: i32) -> (i32, i32) {
    %c0_i32 = arith.constant 0 : i32
    %c0_i32_0 = arith.constant 0 : i32
    %c0_i32_1 = arith.constant 0 : i32
    return %c0_i32, %c0_i32_0 : i32, i32
  }
  func.func @transform_7(%arg0: i32) -> (i32, i32) {
    %c0_i32 = arith.constant 0 : i32
    %c0_i32_0 = arith.constant 0 : i32
    return %arg0, %c0_i32 : i32, i32
  }
}

</mosaic_0001>

<llo_original>
// kernel: tpu_custom_call.1
$region0: #{tpu_custom_call.1}
  #allocation0 [shape = 'u32[]', space=smem, size = 0x4, offset = 0x4, fixed_abs, tag = 'smem constant byte address 0x4 - core index']
  #allocation1 [shape = 'u32[72,128]{1,0:T(1,128)}', space=vmem, size = 0x9000, scoped, tag = 'internal scratch']
  %s0 = inlined_call_operand.vmem [shape: f32[96,32], index: 0, kind: input, shape index: {}]
  %s1 = inlined_call_operand.vmem [shape: bf16[32,160], index: 1, kind: input, shape index: {}]
  %s2 = inlined_call_operand.vmem [shape: f32[1,160], index: 2, kind: input, shape index: {}]
  %s3 = inlined_call_operand.vmem [shape: bf16[32,32], index: 3, kind: input, shape index: {}]
  %s4 = inlined_call_operand.vmem [shape: f32[1,32], index: 4, kind: input, shape index: {}]
  %s5 = inlined_call_operand.vmem [shape: bf16[32,128], index: 5, kind: input, shape index: {}]
  %s6 = inlined_call_operand.vmem [shape: f32[1,128], index: 6, kind: input, shape index: {}]
  %s7 = inlined_call_operand.hbm [shape: bf16[96,128], index: 7, kind: output, shape index: {}]
  %s8 = sld [smem:[#allocation0]]
  $region61: #{tpu_custom_call.1} parent=0
    _
  %s10 = ssub.s32 1, %s8
  %s11 = scalar_select 0, %s10, %s8
  $region1: #{tpu_custom_call.1} parent=0
    #allocation2 [shape = 'u8[24576]{0}', space=vmem, size = 0x6000, scoped, tag = 'output window, operand 0']
    #allocation3 [shape = 's32[2]{0}', space=sflag, size = 0x8, scoped, tag = 'scoped memory for tpu_custom_call.1']
    %12 = vsyncpa [#allocation3], 0
    %s13 = scalar_lea.sflag [#allocation3], 1
    %14 = vsyncpa %s13, 0
    loop: start=0, step=1, limit=4
    $region2: #{tpu_custom_call.1} parent=1 // loop_pre_header
      _
    $region3: #{tpu_custom_call.1} parent=1 // loop_header
      %s16 = sphi 0, %s20
      %p17 = scmp.ge.s32.totalorder %s16, 4
      %s26 = sphi 0, %s28
      %s29 = sphi 0, %s26
      %s30 = sphi 0, %s29
      %s46 = sphi 0, %s30
      %s50 = sphi 0, %s50
      %s52 = sphi 0, %s50
      %s53 = sphi 0, %s52
      %s67 = sphi 0, %s53
      %s71 = sphi 0, %s71
      %s73 = sphi 0, %s71
      %s74 = sphi 0, %s73
      %s88 = sphi 0, %s74
      %s92 = sphi 0, %s92
      %s94 = sphi 0, %s92
      %s95 = sphi 0, %s94
      %s109 = sphi 0, %s95
      %s113 = sphi 0, %s113
      %s115 = sphi 0, %s113
      %s116 = sphi 0, %s115
      %s130 = sphi 0, %s116
      %s134 = sphi 0, %s134
      %s136 = sphi 0, %s134
      %s137 = sphi 0, %s136
      %s151 = sphi 0, %s137
      %s155 = sphi 0, %s155
      %s157 = sphi 0, %s155
      %s158 = sphi 0, %s157
      %s172 = sphi 0, %s158
      %s178 = sphi 0, %s180
      %s181 = sphi 0, %s178
      %s182 = sphi 0, %s181
      %s198 = sphi 0, %s182
    $region4: #{tpu_custom_call.1} parent=1 // loop_header_branch
      %19 = sbr.rel (%p17) target = $region8
    $region5: #{tpu_custom_call.1} parent=1 // loop_body
      %s21 = ssub.s32 %s16, 1
      %s22 = ssub.s32 %s16, 2
      %s23 = sadd.s32 %s16, 1
      %s24 = ssub.s32 %s16, %s23
      %p25 = scmp.eq.s32.totalorder %s24, 0
      %s27 = sadd.s32 %s26, 1
      %s28 = scalar_select %p25, %s26, %s27
      %p31 = pneg %p25
      %p32 = scmp.eq.s32.totalorder %s16, 1
      %p33 = por %p31, %p32
      %p34 = scmp.ne.s32.totalorder %s26, %s29
      %p35 = scmp.eq.s32.totalorder %s16, 0
      %p36 = por %p34, %p35
      %p37 = scmp.ne.s32.totalorder %s26, %s29
      %p38 = scmp.eq.s32.totalorder %s21, 1
      %p39 = por %p37, %p38
      %p40 = scmp.ne.s32.totalorder %s29, %s30
      %p41 = scmp.eq.s32.totalorder %s21, 0
      %p42 = por %p40, %p41
      %p43 = scmp.ne.s32.totalorder %s29, %s30
      %p44 = scmp.eq.s32.totalorder %s22, 1
      %p45 = por %p43, %p44
      %p47 = scmp.ne.s32.totalorder %s30, %s46
      %p48 = scmp.eq.s32.totalorder %s22, 0
      %p49 = por %p47, %p48
      %s51 = sadd.s32 %s50, 1
      %p54 = scmp.eq.s32.totalorder %s16, 1
      %p55 = scmp.ne.s32.totalorder %s50, %s52
      %p56 = scmp.eq.s32.totalorder %s16, 0
      %p57 = por %p55, %p56
      %p58 = scmp.ne.s32.totalorder %s50, %s52
      %p59 = scmp.eq.s32.totalorder %s21, 1
      %p60 = por %p58, %p59
      %p61 = scmp.ne.s32.totalorder %s52, %s53
      %p62 = scmp.eq.s32.totalorder %s21, 0
      %p63 = por %p61, %p62
      %p64 = scmp.ne.s32.totalorder %s52, %s53
      %p65 = scmp.eq.s32.totalorder %s22, 1
      %p66 = por %p64, %p65
      %p68 = scmp.ne.s32.totalorder %s53, %s67
      %p69 = scmp.eq.s32.totalorder %s22, 0
      %p70 = por %p68, %p69
      %s72 = sadd.s32 %s71, 1
      %p75 = scmp.eq.s32.totalorder %s16, 1
      %p76 = scmp.ne.s32.totalorder %s71, %s73
      %p77 = scmp.eq.s32.totalorder %s16, 0
      %p78 = por %p76, %p77
      %p79 = scmp.ne.s32.totalorder %s71, %s73
      %p80 = scmp.eq.s32.totalorder %s21, 1
      %p81 = por %p79, %p80
      %p82 = scmp.ne.s32.totalorder %s73, %s74
      %p83 = scmp.eq.s32.totalorder %s21, 0
      %p84 = por %p82, %p83
      %p85 = scmp.ne.s32.totalorder %s73, %s74
      %p86 = scmp.eq.s32.totalorder %s22, 1
      %p87 = por %p85, %p86
      %p89 = scmp.ne.s32.totalorder %s74, %s88
      %p90 = scmp.eq.s32.totalorder %s22, 0
      %p91 = por %p89, %p90
      %s93 = sadd.s32 %s92, 1
      %p96 = scmp.eq.s32.totalorder %s16, 1
      %p97 = scmp.ne.s32.totalorder %s92, %s94
      %p98 = scmp.eq.s32.totalorder %s16, 0
      %p99 = por %p97, %p98
      %p100 = scmp.ne.s32.totalorder %s92, %s94
      %p101 = scmp.eq.s32.totalorder %s21, 1
      %p102 = por %p100, %p101
      %p103 = scmp.ne.s32.totalorder %s94, %s95
      %p104 = scmp.eq.s32.totalorder %s21, 0
      %p105 = por %p103, %p104
      %p106 = scmp.ne.s32.totalorder %s94, %s95
      %p107 = scmp.eq.s32.totalorder %s22, 1
      %p108 = por %p106, %p107
      %p110 = scmp.ne.s32.totalorder %s95, %s109
      %p111 = scmp.eq.s32.totalorder %s22, 0
      %p112 = por %p110, %p111
      %s114 = sadd.s32 %s113, 1
      %p117 = scmp.eq.s32.totalorder %s16, 1
      %p118 = scmp.ne.s32.totalorder %s113, %s115
      %p119 = scmp.eq.s32.totalorder %s16, 0
      %p120 = por %p118, %p119
      %p121 = scmp.ne.s32.totalorder %s113, %s115
      %p122 = scmp.eq.s32.totalorder %s21, 1
      %p123 = por %p121, %p122
      %p124 = scmp.ne.s32.totalorder %s115, %s116
      %p125 = scmp.eq.s32.totalorder %s21, 0
      %p126 = por %p124, %p125
      %p127 = scmp.ne.s32.totalorder %s115, %s116
      %p128 = scmp.eq.s32.totalorder %s22, 1
      %p129 = por %p127, %p128
      %p131 = scmp.ne.s32.totalorder %s116, %s130
      %p132 = scmp.eq.s32.totalorder %s22, 0
      %p133 = por %p131, %p132
      %s135 = sadd.s32 %s134, 1
      %p138 = scmp.eq.s32.totalorder %s16, 1
      %p139 = scmp.ne.s32.totalorder %s134, %s136
      %p140 = scmp.eq.s32.totalorder %s16, 0
      %p141 = por %p139, %p140
      %p142 = scmp.ne.s32.totalorder %s134, %s136
      %p143 = scmp.eq.s32.totalorder %s21, 1
      %p144 = por %p142, %p143
      %p145 = scmp.ne.s32.totalorder %s136, %s137
      %p146 = scmp.eq.s32.totalorder %s21, 0
      %p147 = por %p145, %p146
      %p148 = scmp.ne.s32.totalorder %s136, %s137
      %p149 = scmp.eq.s32.totalorder %s22, 1
      %p150 = por %p148, %p149
      %p152 = scmp.ne.s32.totalorder %s137, %s151
      %p153 = scmp.eq.s32.totalorder %s22, 0
      %p154 = por %p152, %p153
      %s156 = sadd.s32 %s155, 1
      %p159 = scmp.eq.s32.totalorder %s16, 1
      %p160 = scmp.ne.s32.totalorder %s155, %s157
      %p161 = scmp.eq.s32.totalorder %s16, 0
      %p162 = por %p160, %p161
      %p163 = scmp.ne.s32.totalorder %s155, %s157
      %p164 = scmp.eq.s32.totalorder %s21, 1
      %p165 = por %p163, %p164
      %p166 = scmp.ne.s32.totalorder %s157, %s158
      %p167 = scmp.eq.s32.totalorder %s21, 0
      %p168 = por %p166, %p167
      %p169 = scmp.ne.s32.totalorder %s157, %s158
      %p170 = scmp.eq.s32.totalorder %s22, 1
      %p171 = por %p169, %p170
      %p173 = scmp.ne.s32.totalorder %s158, %s172
      %p174 = scmp.eq.s32.totalorder %s22, 0
      %p175 = por %p173, %p174
      %s176 = ssub.s32 %s16, %s23
      %p177 = scmp.eq.s32.totalorder %s176, 0
      %s179 = sadd.s32 %s178, 1
      %s180 = scalar_select %p177, %s178, %s179
      %p183 = pneg %p177
      %p184 = scmp.eq.s32.totalorder %s16, 1
      %p185 = por %p183, %p184
      %p186 = scmp.ne.s32.totalorder %s178, %s181
      %p187 = scmp.eq.s32.totalorder %s16, 0
      %p188 = por %p186, %p187
      %p189 = scmp.ne.s32.totalorder %s178, %s181
      %p190 = scmp.eq.s32.totalorder %s21, 1
      %p191 = por %p189, %p190
      %p192 = scmp.ne.s32.totalorder %s181, %s182
      %p193 = scmp.eq.s32.totalorder %s21, 0
      %p194 = por %p192, %p193
      %p195 = scmp.ne.s32.totalorder %s181, %s182
      %p196 = scmp.eq.s32.totalorder %s22, 1
      %p197 = por %p195, %p196
      %p199 = scmp.ne.s32.totalorder %s182, %s198
      %p200 = scmp.eq.s32.totalorder %s22, 0
      %p201 = por %p199, %p200
      %p202 = scmp.le.s32.totalorder 1, %s16
      %p203 = scmp.lt.s32.totalorder %s16, 3
      %p204 = pnand %p202, %p203
      %p205 = pneg %p204
      // Predicated region
      $region9: #{tpu_custom_call.1} parent=5 // pred_check
        _
      $region10: #{tpu_custom_call.1} parent=5 // pred_check_branch
        %207 = sbr.rel (%p204) target = $region12
      $region11: #{tpu_custom_call.1} parent=5 // pred_region
        %s208 = ssub.s32 %s16, 1
        // Predicated region
        $region13: #{tpu_custom_call.1} parent=11 // pred_check
          %p209 = pneg %p63
        $region14: #{tpu_custom_call.1} parent=11 // pred_check_branch
          %211 = sbr.rel (%p209) target = $region16
        $region15: #{tpu_custom_call.1} parent=11 // pred_region
          _
        $region16: #{tpu_custom_call.1} parent=11 // pred_fallthru
          _
        // Predicated region
        $region17: #{tpu_custom_call.1} parent=11 // pred_check
          %p212 = pneg %p84
        $region18: #{tpu_custom_call.1} parent=11 // pred_check_branch
          %214 = sbr.rel (%p212) target = $region20
        $region19: #{tpu_custom_call.1} parent=11 // pred_region
          _
        $region20: #{tpu_custom_call.1} parent=11 // pred_fallthru
          _
        // Predicated region
        $region21: #{tpu_custom_call.1} parent=11 // pred_check
          %p215 = pneg %p105
        $region22: #{tpu_custom_call.1} parent=11 // pred_check_branch
          %217 = sbr.rel (%p215) target = $region24
        $region23: #{tpu_custom_call.1} parent=11 // pred_region
          _
        $region24: #{tpu_custom_call.1} parent=11 // pred_fallthru
          _
        // Predicated region
        $region25: #{tpu_custom_call.1} parent=11 // pred_check
          %p218 = pneg %p126
        $region26: #{tpu_custom_call.1} parent=11 // pred_check_branch
          %220 = sbr.rel (%p218) target = $region28
        $region27: #{tpu_custom_call.1} parent=11 // pred_region
          _
        $region28: #{tpu_custom_call.1} parent=11 // pred_fallthru
          _
        // Predicated region
        $region29: #{tpu_custom_call.1} parent=11 // pred_check
          %p221 = pneg %p147
        $region30: #{tpu_custom_call.1} parent=11 // pred_check_branch
          %223 = sbr.rel (%p221) target = $region32
        $region31: #{tpu_custom_call.1} parent=11 // pred_region
          _
        $region32: #{tpu_custom_call.1} parent=11 // pred_fallthru
          _
        // Predicated region
        $region33: #{tpu_custom_call.1} parent=11 // pred_check
          %p224 = pneg %p168
        $region34: #{tpu_custom_call.1} parent=11 // pred_check_branch
          %226 = sbr.rel (%p224) target = $region36
        $region35: #{tpu_custom_call.1} parent=11 // pred_region
          _
        $region36: #{tpu_custom_call.1} parent=11 // pred_fallthru
          _
      $region12: #{tpu_custom_call.1} parent=5 // pred_fallthru
        _
      %p227 = scmp.lt.s32.totalorder %s16, 2
      // Predicated region
      $region37: #{tpu_custom_call.1} parent=5 // pred_check
        %p228 = pneg %p227
      $region38: #{tpu_custom_call.1} parent=5 // pred_check_branch
        %230 = sbr.rel (%p228) target = $region40
      $region39: #{tpu_custom_call.1} parent=5 // pred_region
        // Predicated region
        $region41: #{tpu_custom_call.1} parent=39 // pred_check
          %p231 = pneg %p36
        $region42: #{tpu_custom_call.1} parent=39 // pred_check_branch
          %233 = sbr.rel (%p231) target = $region44
        $region43: #{tpu_custom_call.1} parent=39 // pred_region
          %s234 = smul.u32 6, %s16
          %p235 = scmp.lt.s32.totalorder %s234, 11
          %s236 = scalar_select %p235, %s234, 11
          %s237 = smul.addr %s236, 8
          %s238 = scalar_lea.vmem %s0, %s237
          %s239 = smul.u32 6, %s16
        $region44: #{tpu_custom_call.1} parent=39 // pred_fallthru
          _
      $region40: #{tpu_custom_call.1} parent=5 // pred_fallthru
        _
      %p240 = scmp.le.s32.totalorder 1, %s16
      %p241 = scmp.lt.s32.totalorder %s16, 3
      %p242 = pnand %p240, %p241
      %p243 = pneg %p242
      // Predicated region
      $region45: #{tpu_custom_call.1} parent=5 // pred_check
        _
      $region46: #{tpu_custom_call.1} parent=5 // pred_check_branch
        %245 = sbr.rel (%p242) target = $region48
      $region47: #{tpu_custom_call.1} parent=5 // pred_region
        %s246 = ssub.s32 %s16, 1
        %s247 = smul.u32 6, %s21
        %p248 = scmp.lt.s32.totalorder %s247, 11
        %s249 = scalar_select %p248, %s247, 11
        %s250 = smul.addr %s249, 8
        %s251 = scalar_lea.vmem %s0, %s250
        %p252 = pneg %p42
        %p253 = pneg %p39
        %p254 = pneg %p63
        %p255 = pneg %p60
        %p256 = pneg %p84
        %p257 = pneg %p81
        %p258 = pneg %p105
        %p259 = pneg %p102
        %p260 = pneg %p126
        %p261 = pneg %p123
        %p262 = pneg %p147
        %p263 = pneg %p144
        %p264 = pneg %p168
        %p265 = pneg %p165
        %p266 = pneg %p194
        %p267 = pneg %p191
        %s268 = sand.u32 %s181, 1
        %s269 = scalar_lea.sflag [#allocation3], %s268
        %s270 = sand.u32 %s181, 1
        %s271 = smul.addr %s270, 24
        %s272 = scalar_lea.vmem [#allocation2], %s271
        %s273 = smul.u32 6, %s21
        %p274 = scmp.lt.s32.totalorder %s273, 11
        %s275 = scalar_select %p274, %s273, 11
        %s276 = smul.addr %s275, 8
        %s277 = scalar_lea.vmem %s0, %s276
        %s278 = smul.u32 6, %s21
        %s279 = smul.u32 6, %s21
        %v281 = vld [vmem:[%s277] sm:$0xff]
        %v282 = vld [vmem:[%s277 + $0x8] sm:$0xff]
        %v283 = vld [vmem:[%s277 + $0x10] sm:$0xff]
        %v284 = vld [vmem:[%s277 + $0x18] sm:$0xff]
        %v285 = vld [vmem:[%s277 + $0x20] sm:$0xff]
        %v286 = vld [vmem:[%s277 + $0x28] sm:$0xff]
        %v287 = vpack.c.bf16 %v282, %v281
        %v288 = vpack.c.bf16 %v284, %v283
        %v289 = vpack.c.bf16 %v286, %v285
        %v290 = vld [vmem:[%s1] sm:$0xff]
        %v291 = vld [vmem:[%s1 + $0x8] sm:$0xff]
        %v292 = vld [vmem:[%s1 + $0x10] sm:$0xff]
        %v293 = vld [vmem:[%s1 + $0x18] sm:$0xff]
        %v294 = vld [vmem:[%s2] sm:$0x3]
        %v296 = vperm.slane %v294, 0
        %v297 = vperm.slane %v294, 1
        %v304 = vunpack.c.l.b16 %v290
        %v305 = vunpack.c.h.b16 %v290
        %v306 = vunpack.c.l.b16 %v291
        %v307 = vunpack.c.h.b16 %v291
        %v308 = vunpack.c.l.b16 %v292
        %v309 = vunpack.c.h.b16 %v292
        %v310 = vunpack.c.l.b16 %v293
        %v311 = vunpack.c.h.b16 %v293
        %v312 = vpack.c.b16 %v306, %v304
        %v313 = vpack.c.b16 %v307, %v305
        %v314 = vpack.c.b16 %v310, %v308
        %v315 = vpack.c.b16 %v311, %v309
        %vm320 = vcmask 261120
        %v322 = vsel %vm320, %v287, 0
        %v325 = vsel %vm320, %v288, 0
        %v328 = vsel %vm320, %v289, 0
        %330 = vmatpush.bf16.msra.mxu0 0
        %331 = vmatpush.bf16.msra.mxu0 0
        %332 = vmatpush.bf16.msra.mxu0 0
        %333 = vmatpush.bf16.msra.mxu0 0
        %334 = vmatpush.bf16.msra.mxu0 0
        %335 = vmatpush.bf16.msra.mxu0 0
        %336 = vmatpush.bf16.msra.mxu0 %v314
        %337 = vmatpush.bf16.msra.mxu0 %v312
        %338 = vmatmul.bf16.gmra.mxu0 %v322
        %v339 = vpop.f32.mrf.mxu0
        %v340 = vadd.f32 %v296, %v339
        %v341 = vpop.f32.mrf.mxu0
        %v342 = vadd.f32 %v296, %v341
        %343 = vmatmul.bf16.gmra.mxu0 %v325
        %v344 = vpop.f32.mrf.mxu0
        %v345 = vadd.f32 %v296, %v344
        %v346 = vpop.f32.mrf.mxu0
        %v347 = vadd.f32 %v296, %v346
        %348 = vmatmul.bf16.gmra.mxu0 %v328
        %v349 = vpop.f32.mrf.mxu0
        %v350 = vadd.f32 %v296, %v349
        %v351 = vpop.f32.mrf.mxu0
        %v352 = vadd.f32 %v296, %v351
        %353 = vdwg.mxu0
        %354 = vmatpush.bf16.msra.mxu0 0
        %355 = vmatpush.bf16.msra.mxu0 0
        %356 = vmatpush.bf16.msra.mxu0 0
        %357 = vmatpush.bf16.msra.mxu0 0
        %358 = vmatpush.bf16.msra.mxu0 0
        %359 = vmatpush.bf16.msra.mxu0 0
        %360 = vmatpush.bf16.msra.mxu0 %v315
        %361 = vmatpush.bf16.msra.mxu0 %v313
        %362 = vmatmul.bf16.gmra.mxu0 %v322
        %v363 = vpop.f32.mrf.mxu0
        %v364 = vadd.f32 %v297, %v363
        %v365 = vpop.f32.mrf.mxu0
        %v366 = vadd.f32 %v297, %v365
        %367 = vmatmul.bf16.gmra.mxu0 %v325
        %v368 = vpop.f32.mrf.mxu0
        %v369 = vadd.f32 %v297, %v368
        %v370 = vpop.f32.mrf.mxu0
        %v371 = vadd.f32 %v297, %v370
        %372 = vmatmul.bf16.gmra.mxu0 %v328
        %v373 = vpop.f32.mrf.mxu0
        %v374 = vadd.f32 %v297, %v373
        %v375 = vpop.f32.mrf.mxu0
        %v376 = vadd.f32 %v297, %v375
        %377 = vdwg.mxu0
        %v378 = vmax.f32 %v364, 0.0
        %v379 = vmax.f32 %v366, 0.0
        %v380 = vmax.f32 %v369, 0.0
        %v381 = vmax.f32 %v371, 0.0
        %v382 = vmax.f32 %v374, 0.0
        %v383 = vmax.f32 %v376, 0.0
        %v384 = vpack.c.bf16 %v379, %v378
        %v385 = vpack.c.bf16 %v381, %v380
        %v386 = vpack.c.bf16 %v383, %v382
        %v387 = vld [vmem:[%s3] sm:$0xf]
        %v388 = vld [vmem:[%s3 + $0x4] sm:$0xf]
        %v389 = vld [vmem:[%s3 + $0x8] sm:$0xf]
        %v390 = vld [vmem:[%s3 + $0xc] sm:$0xf]
        %v391 = vld [vmem:[%s4] sm:$0x1]
        %v393 = vperm.slane %v391, 0
        %v399 = vunpack.c.l.b16 %v387
        %v400 = vunpack.c.l.b16 %v388
        %v401 = vunpack.c.l.b16 %v389
        %v402 = vunpack.c.l.b16 %v390
        %v403 = vpack.c.b16 %v400, %v399
        %v404 = vpack.c.b16 %v402, %v401
        %v408 = vsel %vm320, %v384, 0
        %v411 = vsel %vm320, %v385, 0
        %v414 = vsel %vm320, %v386, 0
        %416 = vmatpush.bf16.msra.mxu0 0
        %417 = vmatpush.bf16.msra.mxu0 0
        %418 = vmatpush.bf16.msra.mxu0 0
        %419 = vmatpush.bf16.msra.mxu0 0
        %420 = vmatpush.bf16.msra.mxu0 0
        %421 = vmatpush.bf16.msra.mxu0 0
        %422 = vmatpush.bf16.msra.mxu0 %v404
        %423 = vmatpush.bf16.msra.mxu0 %v403
        %424 = vmatmul.bf16.gmra.mxu0 %v408
        %v425 = vpop.f32.mrf.mxu0
        %v426 = vadd.f32 %v393, %v425
        %v427 = vpop.f32.mrf.mxu0
        %v428 = vadd.f32 %v393, %v427
        %429 = vmatmul.bf16.gmra.mxu0 %v411
        %v430 = vpop.f32.mrf.mxu0
        %v431 = vadd.f32 %v393, %v430
        %v432 = vpop.f32.mrf.mxu0
        %v433 = vadd.f32 %v393, %v432
        %434 = vmatmul.bf16.gmra.mxu0 %v414
        %v435 = vpop.f32.mrf.mxu0
        %v436 = vadd.f32 %v393, %v435
        %v437 = vpop.f32.mrf.mxu0
        %v438 = vadd.f32 %v393, %v437
        %439 = vdwg.mxu0
        %v440 = vmax.f32 %v426, 0.0
        %v441 = vmax.f32 %v428, 0.0
        %v442 = vmax.f32 %v431, 0.0
        %v443 = vmax.f32 %v433, 0.0
        %v444 = vmax.f32 %v436, 0.0
        %v445 = vmax.f32 %v438, 0.0
        %v446 = vpack.c.bf16 %v441, %v440
        %v447 = vpack.c.bf16 %v443, %v442
        %v448 = vpack.c.bf16 %v445, %v444
        %v449 = vld [vmem:[%s5] sm:$0xf]
        %v450 = vld [vmem:[%s5 + $0x4] sm:$0xf]
        %v451 = vld [vmem:[%s5 + $0x8] sm:$0xf]
        %v452 = vld [vmem:[%s5 + $0xc] sm:$0xf]
        %v453 = vld [vmem:[%s6] sm:$0x1]
        %v455 = vperm.slane %v453, 0
        %v461 = vunpack.c.l.b16 %v449
        %v462 = vunpack.c.l.b16 %v450
        %v463 = vunpack.c.l.b16 %v451
        %v464 = vunpack.c.l.b16 %v452
        %v465 = vpack.c.b16 %v462, %v461
        %v466 = vpack.c.b16 %v464, %v463
        %v470 = vsel %vm320, %v446, 0
        %v473 = vsel %vm320, %v447, 0
        %v476 = vsel %vm320, %v448, 0
        %478 = vmatpush.bf16.msra.mxu0 0
        %479 = vmatpush.bf16.msra.mxu0 0
        %480 = vmatpush.bf16.msra.mxu0 0
        %481 = vmatpush.bf16.msra.mxu0 0
        %482 = vmatpush.bf16.msra.mxu0 0
        %483 = vmatpush.bf16.msra.mxu0 0
        %484 = vmatpush.bf16.msra.mxu0 %v466
        %485 = vmatpush.bf16.msra.mxu0 %v465
        %486 = vmatmul.bf16.gmra.mxu0 %v470
        %v487 = vpop.f32.mrf.mxu0
        %v488 = vadd.f32 %v455, %v487
        %v489 = vpop.f32.mrf.mxu0
        %v490 = vadd.f32 %v455, %v489
        %491 = vmatmul.bf16.gmra.mxu0 %v473
        %v492 = vpop.f32.mrf.mxu0
        %v493 = vadd.f32 %v455, %v492
        %v494 = vpop.f32.mrf.mxu0
        %v495 = vadd.f32 %v455, %v494
        %496 = vmatmul.bf16.gmra.mxu0 %v476
        %v497 = vpop.f32.mrf.mxu0
        %v498 = vadd.f32 %v455, %v497
        %v499 = vpop.f32.mrf.mxu0
        %v500 = vadd.f32 %v455, %v499
        %501 = vdwg.mxu0
        %v502 = vlaneseq
        %v503 = vand.u32 %v502, 127
        %vm504 = vcmp.ge.s32.totalorder %v503, 8
        %vm505 = vcmp.lt.s32.totalorder %v503, 12
        %vm506 = vmand %vm504, %vm505
        %v507 = vxor.u32 %v488, 2147483648
        %v508 = vxor.u32 %v490, 2147483648
        %v509 = vxor.u32 %v493, 2147483648
        %v510 = vxor.u32 %v495, 2147483648
        %v511 = vxor.u32 %v498, 2147483648
        %v512 = vxor.u32 %v500, 2147483648
        %v513 = vmul.f32 %v507, 1.442695
        %v514 = vpow.pop %v513
        %v515 = vmul.f32 %v508, 1.442695
        %v516 = vpow.pop %v515
        %v517 = vmul.f32 %v509, 1.442695
        %v518 = vpow.pop %v517
        %v519 = vmul.f32 %v510, 1.442695
        %v520 = vpow.pop %v519
        %v521 = vmul.f32 %v511, 1.442695
        %v522 = vpow.pop %v521
        %v523 = vmul.f32 %v512, 1.442695
        %v524 = vpow.pop %v523
        %v525 = vadd.f32 %v514, 1.0
        %v526 = vadd.f32 %v516, 1.0
        %v527 = vadd.f32 %v518, 1.0
        %v528 = vadd.f32 %v520, 1.0
        %v529 = vadd.f32 %v522, 1.0
        %v530 = vadd.f32 %v524, 1.0
        %v531 = vrcp.pop %v525
        %v532 = vmul.f32 %v525, %v531
        %v533 = vsub.f32 1.0, %v532
        %v534 = vmul.f32 %v531, %v533
        %v535 = vadd.f32 %v531, %v534
        %vm536 = vweird.f32 %v525
        %vm537 = vweird.f32 %v531
        %vm538 = vmor %vm536, %vm537
        %v539 = vsel %vm538, %v531, %v535
        %v540 = vand.u32 2147483647, %v525
        %vm541 = vcmp.eq.f32.partialorder %v540, 8.507059e+37
        %v542 = vand.u32 %v525, 2147483648
        %v543 = vor.u32 1.1754944e-38, %v542
        %v544 = vsel %vm541, %v543, %v539
        %v545 = vmul.f32 1.0, %v544
        %v546 = vrcp.pop %v526
        %v547 = vmul.f32 %v526, %v546
        %v548 = vsub.f32 1.0, %v547
        %v549 = vmul.f32 %v546, %v548
        %v550 = vadd.f32 %v546, %v549
        %vm551 = vweird.f32 %v526
        %vm552 = vweird.f32 %v546
        %vm553 = vmor %vm551, %vm552
        %v554 = vsel %vm553, %v546, %v550
        %v555 = vand.u32 2147483647, %v526
        %vm556 = vcmp.eq.f32.partialorder %v555, 8.507059e+37
        %v557 = vand.u32 %v526, 2147483648
        %v558 = vor.u32 1.1754944e-38, %v557
        %v559 = vsel %vm556, %v558, %v554
        %v560 = vmul.f32 1.0, %v559
        %v561 = vrcp.pop %v527
        %v562 = vmul.f32 %v527, %v561
        %v563 = vsub.f32 1.0, %v562
        %v564 = vmul.f32 %v561, %v563
        %v565 = vadd.f32 %v561, %v564
        %vm566 = vweird.f32 %v527
        %vm567 = vweird.f32 %v561
        %vm568 = vmor %vm566, %vm567
        %v569 = vsel %vm568, %v561, %v565
        %v570 = vand.u32 2147483647, %v527
        %vm571 = vcmp.eq.f32.partialorder %v570, 8.507059e+37
        %v572 = vand.u32 %v527, 2147483648
        %v573 = vor.u32 1.1754944e-38, %v572
        %v574 = vsel %vm571, %v573, %v569
        %v575 = vmul.f32 1.0, %v574
        %v576 = vrcp.pop %v528
        %v577 = vmul.f32 %v528, %v576
        %v578 = vsub.f32 1.0, %v577
        %v579 = vmul.f32 %v576, %v578
        %v580 = vadd.f32 %v576, %v579
        %vm581 = vweird.f32 %v528
        %vm582 = vweird.f32 %v576
        %vm583 = vmor %vm581, %vm582
        %v584 = vsel %vm583, %v576, %v580
        %v585 = vand.u32 2147483647, %v528
        %vm586 = vcmp.eq.f32.partialorder %v585, 8.507059e+37
        %v587 = vand.u32 %v528, 2147483648
        %v588 = vor.u32 1.1754944e-38, %v587
        %v589 = vsel %vm586, %v588, %v584
        %v590 = vmul.f32 1.0, %v589
        %v591 = vrcp.pop %v529
        %v592 = vmul.f32 %v529, %v591
        %v593 = vsub.f32 1.0, %v592
        %v594 = vmul.f32 %v591, %v593
        %v595 = vadd.f32 %v591, %v594
        %vm596 = vweird.f32 %v529
        %vm597 = vweird.f32 %v591
        %vm598 = vmor %vm596, %vm597
        %v599 = vsel %vm598, %v591, %v595
        %v600 = vand.u32 2147483647, %v529
        %vm601 = vcmp.eq.f32.partialorder %v600, 8.507059e+37
        %v602 = vand.u32 %v529, 2147483648
        %v603 = vor.u32 1.1754944e-38, %v602
        %v604 = vsel %vm601, %v603, %v599
        %v605 = vmul.f32 1.0, %v604
        %v606 = vrcp.pop %v530
        %v607 = vmul.f32 %v530, %v606
        %v608 = vsub.f32 1.0, %v607
        %v609 = vmul.f32 %v606, %v608
        %v610 = vadd.f32 %v606, %v609
        %vm611 = vweird.f32 %v530
        %vm612 = vweird.f32 %v606
        %vm613 = vmor %vm611, %vm612
        %v614 = vsel %vm613, %v606, %v610
        %v615 = vand.u32 2147483647, %v530
        %vm616 = vcmp.eq.f32.partialorder %v615, 8.507059e+37
        %v617 = vand.u32 %v530, 2147483648
        %v618 = vor.u32 1.1754944e-38, %v617
        %v619 = vsel %vm616, %v618, %v614
        %v620 = vmul.f32 1.0, %v619
        %v621 = vsel %vm506, %v545, %v340
        %v622 = vsel %vm506, %v560, %v342
        %v623 = vsel %vm506, %v575, %v345
        %v624 = vsel %vm506, %v590, %v347
        %v625 = vsel %vm506, %v605, %v350
        %v626 = vsel %vm506, %v620, %v352
        %v627 = vpack.c.bf16 %v621, %v621
        %v628 = vpack.c.bf16 %v622, %v622
        %v629 = vpack.c.bf16 %v623, %v623
        %v630 = vpack.c.bf16 %v624, %v624
        %v631 = vpack.c.bf16 %v625, %v625
        %v632 = vpack.c.bf16 %v626, %v626
        %633 = vst [vmem:[%s272] sm:$0xf] %v627
        %634 = vst [vmem:[%s272 + $0x4] sm:$0xf] %v628
        %635 = vst [vmem:[%s272 + $0x8] sm:$0xf] %v629
        %636 = vst [vmem:[%s272 + $0xc] sm:$0xf] %v630
        %637 = vst [vmem:[%s272 + $0x10] sm:$0xf] %v631
        %638 = vst [vmem:[%s272 + $0x14] sm:$0xf] %v632
        %s639 = sand.u32 %s181, 1
        %s640 = scalar_lea.sflag [#allocation3], %s639
        %s641 = sand.u32 %s181, 1
        %s642 = smul.addr %s641, 24
        %s643 = scalar_lea.vmem [#allocation2], %s642
        // Predicated region
        $region49: #{tpu_custom_call.1} parent=47 // pred_check
          %p644 = pneg %p191
        $region50: #{tpu_custom_call.1} parent=47 // pred_check_branch
          %646 = sbr.rel (%p644) target = $region52
        $region51: #{tpu_custom_call.1} parent=47 // pred_region
          %s647 = smul.u32 6, %s21
          %649 = vsyncadd %s640, 0
          %s650 = smul.addr %s647, 4
          %s651 = scalar_lea.hbm %s7, %s650
          %s652 = sshll.u32 %s643, 4
          %s653 = int_to_ptr.vmem [resolvable:$true] %s652
          %s654 = sshll.u32 %s651, 4
          %s655 = int_to_ptr.hbm [resolvable:$true] %s654
          %660 = dma.vmem_to_hbm [thread:$0]  %s653, 384, %s655, %s640, 64, 64, 4
        $region52: #{tpu_custom_call.1} parent=47 // pred_fallthru
          _
      $region48: #{tpu_custom_call.1} parent=5 // pred_fallthru
        _
      %p661 = scmp.le.s32.totalorder 2, %s16
      // Predicated region
      $region53: #{tpu_custom_call.1} parent=5 // pred_check
        %p662 = pneg %p661
      $region54: #{tpu_custom_call.1} parent=5 // pred_check_branch
        %664 = sbr.rel (%p662) target = $region56
      $region55: #{tpu_custom_call.1} parent=5 // pred_region
        %s665 = ssub.s32 %s16, 2
        // Predicated region
        $region57: #{tpu_custom_call.1} parent=55 // pred_check
          %p666 = pneg %p197
        $region58: #{tpu_custom_call.1} parent=55 // pred_check_branch
          %668 = sbr.rel (%p666) target = $region60
        $region59: #{tpu_custom_call.1} parent=55 // pred_region
          %s669 = sand.u32 %s182, 1
          %s670 = scalar_lea.sflag [#allocation3], %s669
          %s671 = sand.u32 %s182, 1
          %s672 = smul.addr %s671, 24
          %s673 = scalar_lea.vmem [#allocation2], %s672
          %675 = dma.done %s670, 384
        $region60: #{tpu_custom_call.1} parent=55 // pred_fallthru
          _
      $region56: #{tpu_custom_call.1} parent=5 // pred_fallthru
        _
    $region6: #{tpu_custom_call.1} parent=1 // loop_footer
      %s20 = sadd.s32 1, %s16
    $region7: #{tpu_custom_call.1} parent=1 // loop_footer_branch
      %15 = sbr.rel target = $region3
    $region8: #{tpu_custom_call.1} parent=1 // loop_exit
      _
    %676 = vsyncpa [#allocation3], 1
    %s677 = scalar_lea.sflag [#allocation3], 1
    %678 = vsyncpa %s677, 1

</llo_original>
